<compile_context>
chip_gen: v7x
topology: tpu7x:2x2x1
jax: 0.10.0
libtpu: 0.0.40
codegen_flags: <defaults>
</compile_context>

<pallas_src>
import math

import jax
import jax.numpy as jnp
from jax.experimental import pallas as pl
from jax.experimental.pallas import tpu as pltpu


def _round_up(x: int, m: int) -> int:
    return (x + m - 1) // m * m


def pi_mlp_head_kernel(x_ref, w1_ref, b1_ref, w2_ref, b2_ref, w3_ref, b3_ref,
                       out_ref):
    # Fused 3-layer MLP: Linear -> ReLU -> Linear -> ReLU -> Linear.
    # Inputs/weights may be bf16; accumulation is always f32 on the MXU.
    x = x_ref[...]
    h = jnp.dot(x, w1_ref[...], preferred_element_type=jnp.float32) + b1_ref[...]
    h = jnp.maximum(h, 0.0).astype(w2_ref.dtype)          # hidden_nonlinearity = ReLU
    h = jnp.dot(h, w2_ref[...], preferred_element_type=jnp.float32) + b2_ref[...]
    h = jnp.maximum(h, 0.0).astype(w3_ref.dtype)
    out = jnp.dot(h, w3_ref[...], preferred_element_type=jnp.float32) + b3_ref[...]
    out_ref[...] = out.astype(out_ref.dtype)               # combined [mean | log_std]


def pi_mlp_head_forward(observation, params, action_size, *,
                        compute_dtype=jnp.bfloat16, row_tile=512):
    """Mirrors PiMlpHead.forward: flatten leading dims, run MLP, split, restore."""
    # infer_leading_dims(observation, 1): everything but the last dim is leading.
    lead_shape = observation.shape[:-1]
    feat = observation.shape[-1]
    x = observation.reshape((-1, feat))                    # observation.view(T*B, -1)
    n = x.shape[0]

    (w1, b1), (w2, b2), (w3, b3) = params
    h1, h2, out_sz = w1.shape[1], w2.shape[1], w3.shape[1]
    assert out_sz == 2 * action_size, "last Linear must emit 2*action_size features"
    assert w1.shape[0] == feat and w2.shape[0] == h1 and w3.shape[0] == h2

    # Heavy stream (activations) and weights in compute dtype; biases stay f32
    # and are added into the f32 accumulator.
    x = x.astype(compute_dtype)
    w1c, w2c, w3c = (w.astype(compute_dtype) for w in (w1, w2, w3))
    b1c, b2c, b3c = (b.astype(jnp.float32) for b in (b1, b2, b3))

    # Row tiling: multiple of 8 (f32 sublane), capped at row_tile. Pad ragged n.
    block_rows = min(row_tile, _round_up(max(n, 1), 8))
    n_pad = _round_up(max(n, 1), block_rows)
    if n_pad != n:
        x = jnp.pad(x, ((0, n_pad - n), (0, 0)))

    grid = (pl.cdiv(n_pad, block_rows),)

    # Weights / biases: full block, constant index_map -> DMA'd once, stay
    # VMEM-resident across the whole row grid.
    def full(arr):
        return pl.BlockSpec(arr.shape, lambda i: (0,) * arr.ndim)

    out = pl.pallas_call(
        pi_mlp_head_kernel,
        out_shape=jax.ShapeDtypeStruct((n_pad, out_sz), jnp.float32),
        grid=grid,
        in_specs=[
            pl.BlockSpec((block_rows, feat), lambda i: (i, 0)),   # x: row-tiled
            full(w1c), full(b1c),
            full(w2c), full(b2c),
            full(w3c), full(b3c),
        ],
        out_specs=pl.BlockSpec((block_rows, out_sz), lambda i: (i, 0)),
        compiler_params=pltpu.CompilerParams(
            dimension_semantics=("parallel",)),   # shard row tiles across TCs (v7x)
    )(x, w1c, b1c, w2c, b2c, w3c, b3c)

    out = out[:n]
    # Split + restore_leading_dims in the wrapper (free layout plumbing).
    mean = out[:, :action_size].reshape(lead_shape + (action_size,))
    log_std = out[:, action_size:].reshape(lead_shape + (action_size,))
    return mean, log_std


def init_linear(key, fan_in, fan_out):
    # PyTorch nn.Linear default init: U(-1/sqrt(fan_in), 1/sqrt(fan_in))
    kw, kb = jax.random.split(key)
    bound = 1.0 / math.sqrt(fan_in)
    w = jax.random.uniform(kw, (fan_in, fan_out), jnp.float32, -bound, bound)
    b = jax.random.uniform(kb, (1, fan_out), jnp.float32, -bound, bound)
    return w, b


def _reference(observation, params, action_size):
    lead_shape = observation.shape[:-1]
    x = observation.reshape((-1, observation.shape[-1]))
    (w1, b1), (w2, b2), (w3, b3) = params
    h = jnp.maximum(x @ w1 + b1, 0.0)
    h = jnp.maximum(h @ w2 + b2, 0.0)
    out = h @ w3 + b3
    return (out[:, :action_size].reshape(lead_shape + (action_size,)),
            out[:, action_size:].reshape(lead_shape + (action_size,)))


if __name__ == "__main__":
    key = jax.random.PRNGKey(0)

    # Module hyperparameters (synthetic, deterministic).
    input_size = 16
    action_size = 4
    hidden_sizes = [32, 32]
    output_size = action_size * 2

    k_obs, k_obs2, k1, k2, k3 = jax.random.split(key, 5)

    params = (
        init_linear(k1, input_size, hidden_sizes[0]),
        init_linear(k2, hidden_sizes[0], hidden_sizes[1]),
        init_linear(k3, hidden_sizes[1], output_size),
    )

    # --- test 1: [T, B, F], bf16 fast path -------------------------------
    T, B = 2, 4
    observation = jax.random.normal(k_obs, (T, B, input_size), jnp.float32)

    mean, log_std = pi_mlp_head_forward(observation, params, action_size)
    jax.block_until_ready((mean, log_std))

    ref_mean, ref_log_std = _reference(observation, params, action_size)
    assert mean.shape == (T, B, action_size)
    assert log_std.shape == (T, B, action_size)
    assert jnp.allclose(mean, ref_mean, atol=5e-2, rtol=5e-2)
    assert jnp.allclose(log_std, ref_log_std, atol=5e-2, rtol=5e-2)

    # --- test 2: f32 compute path, exact match ---------------------------
    mean32, log_std32 = pi_mlp_head_forward(observation, params, action_size,
                                            compute_dtype=jnp.float32)
    jax.block_until_ready((mean32, log_std32))
    assert jnp.allclose(mean32, ref_mean, atol=1e-5)
    assert jnp.allclose(log_std32, ref_log_std, atol=1e-5)

    # --- test 3: ragged row count (T*B not a multiple of 8) --------------
    T2, B2 = 3, 5
    obs2 = jax.random.normal(k_obs2, (T2, B2, input_size), jnp.float32)
    mean2, log_std2 = pi_mlp_head_forward(obs2, params, action_size,
                                          compute_dtype=jnp.float32)
    jax.block_until_ready((mean2, log_std2))
    ref_mean2, ref_log_std2 = _reference(obs2, params, action_size)
    assert mean2.shape == (T2, B2, action_size)
    assert jnp.allclose(mean2, ref_mean2, atol=1e-5)
    assert jnp.allclose(log_std2, ref_log_std2, atol=1e-5)

    print("KERNEL_OK")
</pallas_src>

<mosaic_0001>
module attributes {stable_mosaic.version = 11 : i64} {
  func.func @pi_mlp_head_kernel(%arg0: i32, %arg1: memref<8x16xbf16, #tpu.memory_space<vmem>>, %arg2: memref<16x32xbf16, #tpu.memory_space<vmem>>, %arg3: memref<1x32xf32, #tpu.memory_space<vmem>>, %arg4: memref<32x32xbf16, #tpu.memory_space<vmem>>, %arg5: memref<1x32xf32, #tpu.memory_space<vmem>>, %arg6: memref<32x8xbf16, #tpu.memory_space<vmem>>, %arg7: memref<1x8xf32, #tpu.memory_space<vmem>>, %arg8: memref<8x8xf32, #tpu.memory_space<vmem>>) attributes {dimension_semantics = [#tpu.dimension_semantics<parallel>], iteration_bounds = array<i64: 1>, scalar_prefetch = 0 : i64, scratch_operands = 0 : i64, tpu.core_type = #tpu.core_type<tc>, window_params = [{transform_indices = @transform_0, window_bounds = array<i64: 8, 16>}, {pipeline_mode = #tpu.pipeline_mode<synchronous>, transform_indices = @transform_1, window_bounds = array<i64: 16, 32>}, {pipeline_mode = #tpu.pipeline_mode<synchronous>, transform_indices = @transform_2, window_bounds = array<i64: 1, 32>}, {pipeline_mode = #tpu.pipeline_mode<synchronous>, transform_indices = @transform_3, window_bounds = array<i64: 32, 32>}, {pipeline_mode = #tpu.pipeline_mode<synchronous>, transform_indices = @transform_4, window_bounds = array<i64: 1, 32>}, {pipeline_mode = #tpu.pipeline_mode<synchronous>, transform_indices = @transform_5, window_bounds = array<i64: 32, 8>}, {pipeline_mode = #tpu.pipeline_mode<synchronous>, transform_indices = @transform_6, window_bounds = array<i64: 1, 8>}, {transform_indices = @transform_7, window_bounds = array<i64: 8, 8>}]} {
    %c0 = arith.constant 0 : index
    %c0_0 = arith.constant 0 : index
    %0 = vector.load %arg1[%c0, %c0_0] : memref<8x16xbf16, #tpu.memory_space<vmem>>, vector<8x16xbf16>
    %c0_1 = arith.constant 0 : index
    %c0_2 = arith.constant 0 : index
    %1 = vector.load %arg2[%c0_1, %c0_2] : memref<16x32xbf16, #tpu.memory_space<vmem>>, vector<16x32xbf16>
    %cst = arith.constant dense<0.000000e+00> : vector<8x32xf32>
    %2 = tpu.matmul %0, %1, %cst {dimension_numbers = #tpu.dot_dimension_numbers<[1], [0], [0], [1], [0, 0, 1, 1], [], []>} : vector<8x16xbf16>, vector<16x32xbf16>, vector<8x32xf32> -> vector<8x32xf32>
    %c0_3 = arith.constant 0 : index
    %c0_4 = arith.constant 0 : index
    %3 = vector.load %arg3[%c0_3, %c0_4] : memref<1x32xf32, #tpu.memory_space<vmem>>, vector<1x32xf32>
    %4 = vector.broadcast %3 : vector<1x32xf32> to vector<8x32xf32>
    %5 = arith.addf %2, %4 : vector<8x32xf32>
    %cst_5 = arith.constant 0.000000e+00 : f32
    %6 = vector.broadcast %cst_5 : f32 to vector<8x32xf32>
    %7 = arith.maximumf %5, %6 : vector<8x32xf32>
    %8 = arith.truncf %7 : vector<8x32xf32> to vector<8x32xbf16>
    %c0_6 = arith.constant 0 : index
    %c0_7 = arith.constant 0 : index
    %9 = vector.load %arg4[%c0_6, %c0_7] : memref<32x32xbf16, #tpu.memory_space<vmem>>, vector<32x32xbf16>
    %cst_8 = arith.constant dense<0.000000e+00> : vector<8x32xf32>
    %10 = tpu.matmul %8, %9, %cst_8 {dimension_numbers = #tpu.dot_dimension_numbers<[1], [0], [0], [1], [0, 0, 1, 1], [], []>} : vector<8x32xbf16>, vector<32x32xbf16>, vector<8x32xf32> -> vector<8x32xf32>
    %c0_9 = arith.constant 0 : index
    %c0_10 = arith.constant 0 : index
    %11 = vector.load %arg5[%c0_9, %c0_10] : memref<1x32xf32, #tpu.memory_space<vmem>>, vector<1x32xf32>
    %12 = vector.broadcast %11 : vector<1x32xf32> to vector<8x32xf32>
    %13 = arith.addf %10, %12 : vector<8x32xf32>
    %cst_11 = arith.constant 0.000000e+00 : f32
    %14 = vector.broadcast %cst_11 : f32 to vector<8x32xf32>
    %15 = arith.maximumf %13, %14 : vector<8x32xf32>
    %16 = arith.truncf %15 : vector<8x32xf32> to vector<8x32xbf16>
    %c0_12 = arith.constant 0 : index
    %c0_13 = arith.constant 0 : index
    %17 = vector.load %arg6[%c0_12, %c0_13] : memref<32x8xbf16, #tpu.memory_space<vmem>>, vector<32x8xbf16>
    %cst_14 = arith.constant dense<0.000000e+00> : vector<8x8xf32>
    %18 = tpu.matmul %16, %17, %cst_14 {dimension_numbers = #tpu.dot_dimension_numbers<[1], [0], [0], [1], [0, 0, 1, 1], [], []>} : vector<8x32xbf16>, vector<32x8xbf16>, vector<8x8xf32> -> vector<8x8xf32>
    %c0_15 = arith.constant 0 : index
    %c0_16 = arith.constant 0 : index
    %19 = vector.load %arg7[%c0_15, %c0_16] : memref<1x8xf32, #tpu.memory_space<vmem>>, vector<1x8xf32>
    %20 = vector.broadcast %19 : vector<1x8xf32> to vector<8x8xf32>
    %21 = arith.addf %18, %20 : vector<8x8xf32>
    %c0_17 = arith.constant 0 : index
    %c0_18 = arith.constant 0 : index
    %22 = vector.load %arg8[%c0_17, %c0_18] : memref<8x8xf32, #tpu.memory_space<vmem>>, vector<8x8xf32>
    tpu.vector_store %arg8[%c0_17, %c0_18], %21 {strides = array<i32>} : memref<8x8xf32, #tpu.memory_space<vmem>>, vector<8x8xf32>,
    return
  }
  func.func @transform_0(%arg0: i32) -> (i32, i32) {
    %c0_i32 = arith.constant 0 : i32
    %c0_i32_0 = arith.constant 0 : i32
    return %arg0, %c0_i32 : i32, i32
  }
  func.func @transform_1(%arg0: i32) -> (i32, i32) {
    %c0_i32 = arith.constant 0 : i32
    %c0_i32_0 = arith.constant 0 : i32
    %c0_i32_1 = arith.constant 0 : i32
    return %c0_i32, %c0_i32_0 : i32, i32
  }
  func.func @transform_2(%arg0: i32) -> (i32, i32) {
    %c0_i32 = arith.constant 0 : i32
    %c0_i32_0 = arith.constant 0 : i32
    %c0_i32_1 = arith.constant 0 : i32
    return %c0_i32, %c0_i32_0 : i32, i32
  }
  func.func @transform_3(%arg0: i32) -> (i32, i32) {
    %c0_i32 = arith.constant 0 : i32
    %c0_i32_0 = arith.constant 0 : i32
    %c0_i32_1 = arith.constant 0 : i32
    return %c0_i32, %c0_i32_0 : i32, i32
  }
  func.func @transform_4(%arg0: i32) -> (i32, i32) {
    %c0_i32 = arith.constant 0 : i32
    %c0_i32_0 = arith.constant 0 : i32
    %c0_i32_1 = arith.constant 0 : i32
    return %c0_i32, %c0_i32_0 : i32, i32
  }
  func.func @transform_5(%arg0: i32) -> (i32, i32) {
    %c0_i32 = arith.constant 0 : i32
    %c0_i32_0 = arith.constant 0 : i32
    %c0_i32_1 = arith.constant 0 : i32
    return %c0_i32, %c0_i32_0 : i32, i32
  }
  func.func @transform_6(%arg0: i32) -> (i32, i32) {
    %c0_i32 = arith.constant 0 : i32
    %c0_i32_0 = arith.constant 0 : i32
    %c0_i32_1 = arith.constant 0 : i32
    return %c0_i32, %c0_i32_0 : i32, i32
  }
  func.func @transform_7(%arg0: i32) -> (i32, i32) {
    %c0_i32 = arith.constant 0 : i32
    %c0_i32_0 = arith.constant 0 : i32
    return %arg0, %c0_i32 : i32, i32
  }
}

</mosaic_0001>

<llo_original>
// kernel: tpu_custom_call.1
$region0: #{tpu_custom_call.1}
  #allocation0 [shape = 'u32[]', space=smem, size = 0x4, offset = 0x4, fixed_abs, tag = 'smem constant byte address 0x4 - core index']
  #allocation1 [shape = 'u32[144,128]{1,0:T(1,128)}', space=vmem, size = 0x12000, scoped, tag = 'internal scratch']
  %s0 = inlined_call_operand.vmem [shape: bf16[8,16], index: 0, kind: input, shape index: {}]
  %s1 = inlined_call_operand.vmem [shape: bf16[16,32], index: 1, kind: input, shape index: {}]
  %s2 = inlined_call_operand.vmem [shape: f32[1,32], index: 2, kind: input, shape index: {}]
  %s3 = inlined_call_operand.vmem [shape: bf16[32,32], index: 3, kind: input, shape index: {}]
  %s4 = inlined_call_operand.vmem [shape: f32[1,32], index: 4, kind: input, shape index: {}]
  %s5 = inlined_call_operand.vmem [shape: bf16[32,8], index: 5, kind: input, shape index: {}]
  %s6 = inlined_call_operand.vmem [shape: f32[1,8], index: 6, kind: input, shape index: {}]
  %s7 = inlined_call_operand.hbm [shape: f32[8,8], index: 7, kind: output, shape index: {}]
  %s8 = sld [smem:[#allocation0]]
  $region38: #{tpu_custom_call.1} parent=0
    _
  %s10 = ssub.s32 1, %s8
  %s11 = scalar_select 0, %s10, %s8
  $region1: #{tpu_custom_call.1} parent=0
    #allocation2 [shape = 'u8[4096]{0}', space=vmem, size = 0x1000, scoped, tag = 'output window, operand 0, single buffered']
    #allocation3 [shape = 's32[1]{0}', space=sflag, size = 0x4, scoped, tag = 'scoped memory for tpu_custom_call.1']
    %12 = vsyncpa [#allocation3], 0
    // Predicated region
    $region2: #{tpu_custom_call.1} parent=1 // pred_check
      _
    $region3: #{tpu_custom_call.1} parent=1 // pred_check_branch
      %14 = sbr.rel (0) target = $region5
    $region4: #{tpu_custom_call.1} parent=1 // pred_region
      _
    $region5: #{tpu_custom_call.1} parent=1 // pred_fallthru
      _
    // Predicated region
    $region6: #{tpu_custom_call.1} parent=1 // pred_check
      _
    $region7: #{tpu_custom_call.1} parent=1 // pred_check_branch
      %16 = sbr.rel (0) target = $region9
    $region8: #{tpu_custom_call.1} parent=1 // pred_region
      _
    $region9: #{tpu_custom_call.1} parent=1 // pred_fallthru
      _
    // Predicated region
    $region10: #{tpu_custom_call.1} parent=1 // pred_check
      _
    $region11: #{tpu_custom_call.1} parent=1 // pred_check_branch
      %18 = sbr.rel (0) target = $region13
    $region12: #{tpu_custom_call.1} parent=1 // pred_region
      _
    $region13: #{tpu_custom_call.1} parent=1 // pred_fallthru
      _
    // Predicated region
    $region14: #{tpu_custom_call.1} parent=1 // pred_check
      _
    $region15: #{tpu_custom_call.1} parent=1 // pred_check_branch
      %20 = sbr.rel (0) target = $region17
    $region16: #{tpu_custom_call.1} parent=1 // pred_region
      _
    $region17: #{tpu_custom_call.1} parent=1 // pred_fallthru
      _
    // Predicated region
    $region18: #{tpu_custom_call.1} parent=1 // pred_check
      _
    $region19: #{tpu_custom_call.1} parent=1 // pred_check_branch
      %22 = sbr.rel (0) target = $region21
    $region20: #{tpu_custom_call.1} parent=1 // pred_region
      _
    $region21: #{tpu_custom_call.1} parent=1 // pred_fallthru
      _
    // Predicated region
    $region22: #{tpu_custom_call.1} parent=1 // pred_check
      _
    $region23: #{tpu_custom_call.1} parent=1 // pred_check_branch
      %24 = sbr.rel (0) target = $region25
    $region24: #{tpu_custom_call.1} parent=1 // pred_region
      _
    $region25: #{tpu_custom_call.1} parent=1 // pred_fallthru
      _
    // Predicated region
    $region26: #{tpu_custom_call.1} parent=1 // pred_check
      _
    $region27: #{tpu_custom_call.1} parent=1 // pred_check_branch
      %26 = sbr.rel (0) target = $region29
    $region28: #{tpu_custom_call.1} parent=1 // pred_region
      _
    $region29: #{tpu_custom_call.1} parent=1 // pred_fallthru
      _
    %v28 = vld [vmem:[%s0] sm:$0xf]
    %v29 = vld [vmem:[%s1] sm:$0xf]
    %v30 = vld [vmem:[%s1 + $0x4] sm:$0xf]
    %v31 = vld [vmem:[%s2] sm:$0x1]
    %v33 = vlaneseq
    %v34 = vshrl.u32 %v33, 7
    %v35 = vsub.s32 0, %v34
    %v36 = vrot.slane %v31, %v35
    %v40 = vunpack.c.l.b16 %v29
    %v41 = vunpack.c.l.b16 %v30
    %v42 = vpack.c.b16 %v41, %v40
    %vm44 = vcmask 130048
    %v46 = vsel %vm44, %v28, 0
    %48 = vmatprep.subr.bf16.mxu0 0
    %49 = vmatpush1.bf16.msra.mxu0 %v42
    %50 = vmatprep.subr.bf16.mxu0 0
    %51 = vmatpush1.bf16.msra.mxu0 0
    %52 = vmatprep.subr.bf16.mxu0 0
    %53 = vmatpush1.bf16.msra.mxu0 0
    %54 = vmatprep.subr.bf16.mxu0 0
    %55 = vmatpush1.bf16.msra.mxu0 0
    %56 = vmatprep.subr.bf16.mxu0 0
    %57 = vmatpush1.bf16.msra.mxu0 0
    %58 = vmatprep.subr.bf16.mxu0 0
    %59 = vmatpush1.bf16.msra.mxu0 0
    %60 = vmatprep.subr.bf16.mxu0 0
    %61 = vmatpush1.bf16.msra.mxu0 0
    %62 = vmatprep.subr.bf16.mxu0 0
    %63 = vmatpush1.bf16.msra.mxu0 0
    %64 = vmatprep.subr.bf16.mxu0 0
    %65 = vmatpush1.bf16.msra.mxu0 0
    %66 = vmatprep.subr.bf16.mxu0 0
    %67 = vmatpush1.bf16.msra.mxu0 0
    %68 = vmatprep.subr.bf16.mxu0 0
    %69 = vmatpush1.bf16.msra.mxu0 0
    %70 = vmatprep.subr.bf16.mxu0 0
    %71 = vmatpush1.bf16.msra.mxu0 0
    %72 = vmatprep.subr.bf16.mxu0 0
    %73 = vmatpush1.bf16.msra.mxu0 0
    %74 = vmatprep.subr.bf16.mxu0 0
    %75 = vmatpush1.bf16.msra.mxu0 0
    %76 = vmatprep.subr.bf16.mxu0 0
    %77 = vmatpush1.bf16.msra.mxu0 0
    %78 = vmatprep.subr.bf16.mxu0 0
    %79 = vmatpush1.bf16.msra.mxu0 0
    %80 = vmatprep.mubr.bf16.mxu0 0
    %81 = vmatmul.mubr.bf16.gmra.mrb[0].mxu0 %v46
    %v82 = vpop.f32.mrb[0].mxu0
    %v83 = vadd.f32 %v36, %v82
    %v84 = vpop.f32.mrb[0].mxu0
    %v85 = vpop.f32.mrb[0].mxu0
    %v86 = vpop.f32.mrb[0].mxu0
    %87 = vdwg.mxu0
    %v88 = vmax.f32 %v83, 0.0
    %v89 = vpack.c.bf16 %v88, %v88
    %v90 = vld [vmem:[%s3] sm:$0xf]
    %v91 = vld [vmem:[%s3 + $0x4] sm:$0xf]
    %v92 = vld [vmem:[%s3 + $0x8] sm:$0xf]
    %v93 = vld [vmem:[%s3 + $0xc] sm:$0xf]
    %v94 = vld [vmem:[%s4] sm:$0x1]
    %v96 = vlaneseq
    %v97 = vshrl.u32 %v96, 7
    %v98 = vsub.s32 0, %v97
    %v99 = vrot.slane %v94, %v98
    %v105 = vunpack.c.l.b16 %v90
    %v106 = vunpack.c.l.b16 %v91
    %v107 = vunpack.c.l.b16 %v92
    %v108 = vunpack.c.l.b16 %v93
    %v109 = vpack.c.b16 %v106, %v105
    %v110 = vpack.c.b16 %v108, %v107
    %vm113 = vcmask 261120
    %v115 = vsel %vm113, %v89, 0
    %117 = vmatprep.subr.bf16.mxu0 0
    %118 = vmatpush1.bf16.msra.mxu0 %v109
    %119 = vmatprep.subr.bf16.mxu0 0
    %120 = vmatpush1.bf16.msra.mxu0 %v110
    %121 = vmatprep.subr.bf16.mxu0 0
    %122 = vmatpush1.bf16.msra.mxu0 0
    %123 = vmatprep.subr.bf16.mxu0 0
    %124 = vmatpush1.bf16.msra.mxu0 0
    %125 = vmatprep.subr.bf16.mxu0 0
    %126 = vmatpush1.bf16.msra.mxu0 0
    %127 = vmatprep.subr.bf16.mxu0 0
    %128 = vmatpush1.bf16.msra.mxu0 0
    %129 = vmatprep.subr.bf16.mxu0 0
    %130 = vmatpush1.bf16.msra.mxu0 0
    %131 = vmatprep.subr.bf16.mxu0 0
    %132 = vmatpush1.bf16.msra.mxu0 0
    %133 = vmatprep.subr.bf16.mxu0 0
    %134 = vmatpush1.bf16.msra.mxu0 0
    %135 = vmatprep.subr.bf16.mxu0 0
    %136 = vmatpush1.bf16.msra.mxu0 0
    %137 = vmatprep.subr.bf16.mxu0 0
    %138 = vmatpush1.bf16.msra.mxu0 0
    %139 = vmatprep.subr.bf16.mxu0 0
    %140 = vmatpush1.bf16.msra.mxu0 0
    %141 = vmatprep.subr.bf16.mxu0 0
    %142 = vmatpush1.bf16.msra.mxu0 0
    %143 = vmatprep.subr.bf16.mxu0 0
    %144 = vmatpush1.bf16.msra.mxu0 0
    %145 = vmatprep.subr.bf16.mxu0 0
    %146 = vmatpush1.bf16.msra.mxu0 0
    %147 = vmatprep.subr.bf16.mxu0 0
    %148 = vmatpush1.bf16.msra.mxu0 0
    %149 = vmatprep.mubr.bf16.mxu0 0
    %150 = vmatmul.mubr.bf16.gmra.mrb[0].mxu0 %v115
    %v151 = vpop.f32.mrb[0].mxu0
    %v152 = vadd.f32 %v99, %v151
    %v153 = vpop.f32.mrb[0].mxu0
    %v154 = vpop.f32.mrb[0].mxu0
    %v155 = vpop.f32.mrb[0].mxu0
    %156 = vdwg.mxu0
    %v157 = vmax.f32 %v152, 0.0
    %v158 = vpack.c.bf16 %v157, %v157
    %v159 = vld [vmem:[%s5] sm:$0xf]
    %v160 = vld [vmem:[%s5 + $0x4] sm:$0xf]
    %v161 = vld [vmem:[%s5 + $0x8] sm:$0xf]
    %v162 = vld [vmem:[%s5 + $0xc] sm:$0xf]
    %v163 = vld [vmem:[%s6] sm:$0x1]
    %v165 = vlaneseq
    %v166 = vshrl.u32 %v165, 7
    %v167 = vsub.s32 0, %v166
    %v168 = vrot.slane %v163, %v167
    %v174 = vunpack.c.l.b16 %v159
    %v175 = vunpack.c.l.b16 %v160
    %v176 = vunpack.c.l.b16 %v161
    %v177 = vunpack.c.l.b16 %v162
    %v178 = vpack.c.b16 %v175, %v174
    %v179 = vpack.c.b16 %v177, %v176
    %v183 = vsel %vm113, %v158, 0
    %185 = vmatprep.subr.bf16.mxu0 0
    %186 = vmatpush1.bf16.msra.mxu0 %v178
    %187 = vmatprep.subr.bf16.mxu0 0
    %188 = vmatpush1.bf16.msra.mxu0 %v179
    %189 = vmatprep.subr.bf16.mxu0 0
    %190 = vmatpush1.bf16.msra.mxu0 0
    %191 = vmatprep.subr.bf16.mxu0 0
    %192 = vmatpush1.bf16.msra.mxu0 0
    %193 = vmatprep.subr.bf16.mxu0 0
    %194 = vmatpush1.bf16.msra.mxu0 0
    %195 = vmatprep.subr.bf16.mxu0 0
    %196 = vmatpush1.bf16.msra.mxu0 0
    %197 = vmatprep.subr.bf16.mxu0 0
    %198 = vmatpush1.bf16.msra.mxu0 0
    %199 = vmatprep.subr.bf16.mxu0 0
    %200 = vmatpush1.bf16.msra.mxu0 0
    %201 = vmatprep.subr.bf16.mxu0 0
    %202 = vmatpush1.bf16.msra.mxu0 0
    %203 = vmatprep.subr.bf16.mxu0 0
    %204 = vmatpush1.bf16.msra.mxu0 0
    %205 = vmatprep.subr.bf16.mxu0 0
    %206 = vmatpush1.bf16.msra.mxu0 0
    %207 = vmatprep.subr.bf16.mxu0 0
    %208 = vmatpush1.bf16.msra.mxu0 0
    %209 = vmatprep.subr.bf16.mxu0 0
    %210 = vmatpush1.bf16.msra.mxu0 0
    %211 = vmatprep.subr.bf16.mxu0 0
    %212 = vmatpush1.bf16.msra.mxu0 0
    %213 = vmatprep.subr.bf16.mxu0 0
    %214 = vmatpush1.bf16.msra.mxu0 0
    %215 = vmatprep.subr.bf16.mxu0 0
    %216 = vmatpush1.bf16.msra.mxu0 0
    %217 = vmatprep.mubr.bf16.mxu0 0
    %218 = vmatmul.mubr.bf16.gmra.mrb[0].mxu0 %v183
    %v219 = vpop.f32.mrb[0].mxu0
    %v220 = vadd.f32 %v168, %v219
    %v221 = vpop.f32.mrb[0].mxu0
    %v222 = vpop.f32.mrb[0].mxu0
    %v223 = vpop.f32.mrb[0].mxu0
    %224 = vdwg.mxu0
    %vm225 = vcmask 64512
    %226 = vst.msk [vmem:[#allocation2] sm:$0xff] %vm225, %v220
    // Predicated region
    $region30: #{tpu_custom_call.1} parent=1 // pred_check
      _
    $region31: #{tpu_custom_call.1} parent=1 // pred_check_branch
      %228 = sbr.rel (0) target = $region33
    $region32: #{tpu_custom_call.1} parent=1 // pred_region
      %s230 = ssub.s32 128, 128
      %231 = vsyncadd [#allocation3], %s230
      %s233 = sshll.u32 [#allocation2], 4
      %s234 = int_to_ptr.vmem [resolvable:$true] %s233
      %236 = dma.vmem_to_hbm [thread:$0]  %s234, 128, %s7, [#allocation3]
    $region33: #{tpu_custom_call.1} parent=1 // pred_fallthru
      _
    // Predicated region
    $region34: #{tpu_custom_call.1} parent=1 // pred_check
      _
    $region35: #{tpu_custom_call.1} parent=1 // pred_check_branch
      %238 = sbr.rel (0) target = $region37
    $region36: #{tpu_custom_call.1} parent=1 // pred_region
      %239 = dma.done [#allocation3], 128
    $region37: #{tpu_custom_call.1} parent=1 // pred_fallthru
      _
    %240 = vsyncpa [#allocation3], 1

</llo_original>
